<compile_context>
chip_gen: v6e
topology: v6e:2x2x1
jax: 0.10.0
libtpu: 0.0.40
codegen_flags: <defaults>
</compile_context>

<pallas_src>
import functools

import jax
import jax.numpy as jnp
from jax.experimental import pallas as pl
from jax.experimental.pallas import tpu as pltpu


def _gelu(x, approx):
    if approx:
        # tanh approximation -> transcendental lands on the EUP slot.
        c = 0.7978845608028654  # sqrt(2/pi)
        return 0.5 * x * (1.0 + jnp.tanh(c * (x + 0.044715 * (x * x * x))))
    # PyTorch nn.GELU() default (approximate='none'): 0.5*x*(1+erf(x/sqrt(2)))
    return 0.5 * x * (1.0 + jax.lax.erf(x * 0.7071067811865476))


def _dwpw_kernel(halo_ref, x_ref, dww_ref, b1_ref, pww_ref, b2_ref, out_ref, *,
                 W, approx_gelu, pw_vpu, mxu_bf16):
    # halo_ref: (1, 1, 2*Cin, W)   [row above ; row below] of this stripe (zeros at borders)
    # x_ref   : (1, Cin, TH*W)     stripe body, flattened over (TH, W)
    # dww_ref : (9, Cin, 1)        depthwise 3x3 weights * BN1 scale, row = kh*3 + kw
    # b1_ref  : (Cin, 1)           folded depthwise bias + BN1
    # pww_ref : (Cout, Cin)        pointwise weights * BN2 scale
    # b2_ref  : (Cout, 1)          folded pointwise bias + BN2
    # out_ref : (1, Cout, TH*W)    lane-dense output slab
    f32 = jnp.float32
    Cin = x_ref.shape[1]
    THW = x_ref.shape[2]

    dww = dww_ref[...].astype(f32)       # (9, Cin, 1)
    b1 = b1_ref[...].astype(f32)         # (Cin, 1)
    pww = pww_ref[...].astype(f32)       # (Cout, Cin)
    b2 = b2_ref[...].astype(f32)         # (Cout, 1)

    def roll_lanes(v, shift):
        # Circular shift toward higher lane indices (jnp.roll semantics), static shift.
        # TODO(synk): switch to pltpu.roll (native XLU rotate) once its rotation
        #             direction is verified on hardware; concat-of-slices is direction-safe.
        n = v.shape[-1]
        s = shift % n
        if s == 0:
            return v
        return jnp.concatenate([v[:, n - s:], v[:, :n - s]], axis=-1)

    def pointwise(y):
        # (Cout, Cin) x (Cin, L) -> (Cout, L), pre-bias.
        if pw_vpu:
            # Tiny Cin/Cout: VPU broadcast-MAC; the MXU would be push/pop-latency bound.
            z = pww[:, 0:1] * y[0:1, :]
            for c in range(1, Cin):
                z = z + pww[:, c:c + 1] * y[c:c + 1, :]
            return z
        if mxu_bf16:
            return jnp.dot(pww.astype(jnp.bfloat16), y.astype(jnp.bfloat16),
                           preferred_element_type=f32)
        return jnp.dot(pww, y, preferred_element_type=f32)

    # ---------------- main stripe path (exact for rows 1 .. TH-2) ----------------
    xm = x_ref[0].astype(f32)                 # (Cin, TH*W): single lane-aligned load
    b_up = roll_lanes(xm, W)                  # row above; first-row lanes are garbage
    b_dn = roll_lanes(xm, -W)                 # row below; last-row lanes are garbage

    # Group the 9 taps by kw: 9 MACs, 2 lane shifts, 2 selects (instead of 9 shifted
    # loads and 6 selects).
    ctr = dww[1] * b_up + dww[4] * xm + dww[7] * b_dn
    lft = dww[0] * b_up + dww[3] * xm + dww[6] * b_dn
    rgt = dww[2] * b_up + dww[5] * xm + dww[8] * b_dn

    col = jax.lax.broadcasted_iota(jnp.int32, (1, THW), 1) % W
    acc = (ctr
           + jnp.where(col != 0, roll_lanes(lft, 1), 0.0)        # left tap, zero-pad col 0
           + jnp.where(col != W - 1, roll_lanes(rgt, -1), 0.0))  # right tap, zero-pad col W-1

    y = _gelu(acc + b1, approx_gelu)
    z = _gelu(pointwise(y) + b2, approx_gelu)
    out_ref[0] = z.astype(out_ref.dtype)

    # -------- exact first / last stripe rows (these need the halo rows) --------
    halo = halo_ref[0, 0].astype(f32)         # (2*Cin, W): [top ; bottom]
    top = halo[0:Cin]
    bot = halo[Cin:]
    zc = jnp.zeros((Cin, 1), f32)

    def dw_row(r_up, r_mid, r_dn):            # 3x3 depthwise for one output row (Cin, W)
        c_ = dww[1] * r_up + dww[4] * r_mid + dww[7] * r_dn
        l_ = dww[0] * r_up + dww[3] * r_mid + dww[6] * r_dn
        r_ = dww[2] * r_up + dww[5] * r_mid + dww[8] * r_dn
        c_ = c_ + jnp.concatenate([zc, l_[:, :W - 1]], axis=1)   # left tap, zero-pad col 0
        c_ = c_ + jnp.concatenate([r_[:, 1:], zc], axis=1)       # right tap, zero-pad col W-1
        return c_

    r0 = x_ref[0, :, 0:W].astype(f32)                   # stripe row 0
    r1 = x_ref[0, :, W:2 * W].astype(f32)               # stripe row 1
    rl = x_ref[0, :, THW - W:THW].astype(f32)           # stripe row TH-1
    rm = x_ref[0, :, THW - 2 * W:THW - W].astype(f32)   # stripe row TH-2

    y_first = _gelu(dw_row(top, r0, r1) + b1, approx_gelu)
    out_ref[0, :, 0:W] = _gelu(pointwise(y_first) + b2,
                               approx_gelu).astype(out_ref.dtype)

    y_last = _gelu(dw_row(rm, rl, bot) + b1, approx_gelu)
    out_ref[0, :, THW - W:THW] = _gelu(pointwise(y_last) + b2,
                                       approx_gelu).astype(out_ref.dtype)


def _choose_tile_h(N, H, W, Cin, Cout, vmem_cap):
    """Largest stripe height TH that divides H, keeps TH*W lane-aligned (or TH==H),
    fits a generation-aware per-step VMEM budget, and yields >= 2 grid steps when
    possible (so both v7x TensorCores have work)."""
    budget = min(vmem_cap // 6, 24 * 1024 * 1024)

    def step_bytes(th):
        l = th * W
        live = 6 * Cin * l + 3 * Cout * l      # f32 values live inside the body
        blocks = 2 * (Cin + Cout) * l          # double-buffered pipeline blocks
        return 4 * (live + blocks)

    cands = [th for th in range(2, H + 1)
             if H % th == 0 and (th == H or (th * W) % 128 == 0)]
    fits = [th for th in cands if step_bytes(th) <= budget] or [min(cands)]
    multi = [th for th in fits if N * (H // th) >= 2]
    return max(multi) if multi else max(fits)


def dwpw_conv(x, params, eps=1e-5, tile_h=None, approx_gelu=True,
              pw_vpu=None, mxu_bf16=None):
    """Forward pass of DWPWConv (eval-mode BN).  x: (N, Cin, H, W) in NCHW."""
    N, C, H, W = x.shape
    Cout = params['pw_w'].shape[0]
    dt = x.dtype
    if H < 2 or W < 2:
        raise ValueError("H and W must be >= 2")

    try:
        vmem_cap = int(pltpu.get_tpu_info().vmem_capacity_bytes)
    except Exception:
        vmem_cap = 64 * 1024 * 1024   # conservative default (v7x per-TensorCore VMEM)

    TH = _choose_tile_h(N, H, W, C, Cout, vmem_cap) if tile_h is None else tile_h
    if H % TH != 0 or TH < 2:
        raise ValueError(f"tile_h={TH} must divide H={H} and be >= 2")
    T = H // TH
    if T > 1 and (TH * W) % 128 != 0:
        raise ValueError("TH*W must be a multiple of 128 when tiling over H")
    THW = TH * W

    if pw_vpu is None:
        pw_vpu = (C <= 16 and Cout <= 64)     # MXU badly underutilized at tiny Cin/Cout
    if mxu_bf16 is None:
        mxu_bf16 = (not pw_vpu) and C >= 64   # bf16 MXU operands pay off for larger Cin

    # Per-stripe halo rows (tiny).  Zero rows at the image borders implement the
    # conv's zero padding in H; top/bottom merged -> one small DMA per grid step.
    zrow = jnp.zeros((N, C, 1, W), dt)
    if T > 1:
        top = jnp.concatenate([zrow, x[:, :, TH - 1:H - 1:TH, :]], axis=2)   # (N,C,T,W)
        bot = jnp.concatenate([x[:, :, TH:H:TH, :], zrow], axis=2)
    else:
        top, bot = zrow, zrow
    halo = jnp.concatenate([jnp.transpose(top, (0, 2, 1, 3)),
                            jnp.transpose(bot, (0, 2, 1, 3))], axis=2)       # (N,T,2C,W)
    x_flat = x.reshape(N, C, H * W)            # free reshape (contiguous)

    # Fold conv biases + eval-mode BN into per-channel scale/bias; scales are
    # pre-multiplied into the conv weights so the kernel only does MAC+bias+GELU.
    s1 = params['bn1_g'] / jnp.sqrt(params['bn1_v'] + eps)
    dww = (params['dw_w'].reshape(C, 9) * s1[:, None]).T.reshape(9, C, 1)
    b1 = ((params['dw_b'] - params['bn1_m']) * s1 + params['bn1_b']).reshape(C, 1)
    s2 = params['bn2_g'] / jnp.sqrt(params['bn2_v'] + eps)
    pww = params['pw_w'].reshape(Cout, C) * s2[:, None]
    b2 = ((params['pw_b'] - params['bn2_m']) * s2 + params['bn2_b']).reshape(Cout, 1)

    hw = H * W
    cost = pl.CostEstimate(
        flops=int(N * hw * (18 * C + 2 * C * Cout + 10 * (C + Cout))),
        transcendentals=int(N * hw * (C + Cout)),
        bytes_accessed=int(4 * (N * hw * (C + Cout) + N * T * 2 * C * W
                                + 10 * C + Cout * (C + 1))),
    )

    kernel = functools.partial(_dwpw_kernel, W=W, approx_gelu=approx_gelu,
                               pw_vpu=pw_vpu, mxu_bf16=mxu_bf16)

    out_flat = pl.pallas_call(
        kernel,
        out_shape=jax.ShapeDtypeStruct((N, Cout, H * W), dt),
        grid_spec=pltpu.PrefetchScalarGridSpec(
            num_scalar_prefetch=0,
            grid=(N, T),
            in_specs=[
                pl.BlockSpec((1, 1, 2 * C, W), lambda n, t: (n, t, 0, 0)),   # halo rows
                pl.BlockSpec((1, C, THW), lambda n, t: (n, 0, t)),           # stripe body
                pl.BlockSpec((9, C, 1), lambda n, t: (0, 0, 0)),             # dw weights (BN1 folded)
                pl.BlockSpec((C, 1), lambda n, t: (0, 0)),                   # dw bias/BN1
                pl.BlockSpec((Cout, C), lambda n, t: (0, 0)),                # pw weights (BN2 folded)
                pl.BlockSpec((Cout, 1), lambda n, t: (0, 0)),                # pw bias/BN2
            ],
            out_specs=pl.BlockSpec((1, Cout, THW), lambda n, t: (n, 0, t)),
        ),
        compiler_params=pltpu.CompilerParams(
            dimension_semantics=("parallel", "parallel"),
            vmem_limit_bytes=int(min(vmem_cap * 3 // 4, 96 * 1024 * 1024)),
        ),
        cost_estimate=cost,
    )(halo, x_flat, dww, b1, pww, b2)

    # Free reshape of the lane-dense slab back to NCHW (matches PyTorch output).
    return out_flat.reshape(N, Cout, H, W)


def dwpw_reference(x, params, eps=1e-5):
    """Pure-JAX (XLA) reference of the PyTorch module in eval mode, for checking."""
    N, C, H, W = x.shape
    Cout = params['pw_w'].shape[0]
    y = jax.lax.conv_general_dilated(
        x, params['dw_w'], window_strides=(1, 1), padding=((1, 1), (1, 1)),
        dimension_numbers=('NCHW', 'OIHW', 'NCHW'), feature_group_count=C)
    y = y + params['dw_b'][None, :, None, None]
    s1 = params['bn1_g'] / jnp.sqrt(params['bn1_v'] + eps)
    y = (y - params['bn1_m'][None, :, None, None]) * s1[None, :, None, None] \
        + params['bn1_b'][None, :, None, None]
    y = _gelu(y, approx=False)
    z = jnp.einsum('nchw,oc->nohw', y, params['pw_w'].reshape(Cout, C))
    z = z + params['pw_b'][None, :, None, None]
    s2 = params['bn2_g'] / jnp.sqrt(params['bn2_v'] + eps)
    z = (z - params['bn2_m'][None, :, None, None]) * s2[None, :, None, None] \
        + params['bn2_b'][None, :, None, None]
    return _gelu(z, approx=False)


def init_params(key, inc, outc):
    ks = jax.random.split(key, 12)
    u = lambda k, shape, scale: scale * jax.random.uniform(
        k, shape, jnp.float32, minval=-1.0, maxval=1.0)
    dw_fan_in = 1 * 3 * 3
    pw_fan_in = inc * 1 * 1
    return {
        'dw_w': u(ks[0], (inc, 1, 3, 3), 1.0 / jnp.sqrt(dw_fan_in)),
        'dw_b': u(ks[1], (inc,), 1.0 / jnp.sqrt(dw_fan_in)),
        'bn1_g': 1.0 + 0.1 * u(ks[2], (inc,), 1.0),
        'bn1_b': 0.1 * u(ks[3], (inc,), 1.0),
        'bn1_m': 0.1 * u(ks[4], (inc,), 1.0),
        'bn1_v': 1.0 + 0.1 * jax.random.uniform(ks[5], (inc,), jnp.float32),
        'pw_w': u(ks[6], (outc, inc, 1, 1), 1.0 / jnp.sqrt(pw_fan_in)),
        'pw_b': u(ks[7], (outc,), 1.0 / jnp.sqrt(pw_fan_in)),
        'bn2_g': 1.0 + 0.1 * u(ks[8], (outc,), 1.0),
        'bn2_b': 0.1 * u(ks[9], (outc,), 1.0),
        'bn2_m': 0.1 * u(ks[10], (outc,), 1.0),
        'bn2_v': 1.0 + 0.1 * jax.random.uniform(ks[11], (outc,), jnp.float32),
    }


if __name__ == "__main__":
    key = jax.random.PRNGKey(0)
    k_x, k_p = jax.random.split(key)

    N, inc, H, W = 2, 4, 16, 16
    outc = 8

    x = jax.random.normal(k_x, (N, inc, H, W), jnp.float32)
    params = init_params(k_p, inc, outc)
    ref = dwpw_reference(x, params)

    # Exact-erf GELU path: validates halo / masking / shift machinery against the
    # PyTorch-equivalent reference to tight tolerance (tiled and whole-image tiles).
    out_exact_tiled = dwpw_conv(x, params, tile_h=8, approx_gelu=False)
    out_exact_auto = dwpw_conv(x, params, approx_gelu=False)
    # Default fast path: tanh-approx GELU on the EUP.
    out_fast = dwpw_conv(x, params, tile_h=8)
    jax.block_until_ready((out_exact_tiled, out_exact_auto, out_fast))

    assert out_exact_tiled.shape == (N, outc, H, W), out_exact_tiled.shape
    assert out_exact_auto.shape == (N, outc, H, W), out_exact_auto.shape
    assert out_fast.shape == (N, outc, H, W), out_fast.shape

    err_exact = max(float(jnp.max(jnp.abs(out_exact_tiled - ref))),
                    float(jnp.max(jnp.abs(out_exact_auto - ref))))
    err_fast = float(jnp.max(jnp.abs(out_fast - ref)))
    assert err_exact < 1e-4, f"exact-GELU path max abs error vs reference: {err_exact}"
    assert err_fast < 3e-3, f"approx-GELU path max abs error vs reference: {err_fast}"
    print("KERNEL_OK")
</pallas_src>

<mosaic_0001>
module attributes {stable_mosaic.version = 11 : i64} {
  func.func @_dwpw_kernel(%arg0: i32, %arg1: i32, %arg2: memref<1x1x8x16xf32, #tpu.memory_space<vmem>>, %arg3: memref<1x4x128xf32, #tpu.memory_space<vmem>>, %arg4: memref<9x4x1xf32, #tpu.memory_space<vmem>>, %arg5: memref<4x1xf32, #tpu.memory_space<vmem>>, %arg6: memref<8x4xf32, #tpu.memory_space<vmem>>, %arg7: memref<8x1xf32, #tpu.memory_space<vmem>>, %arg8: memref<1x8x128xf32, #tpu.memory_space<vmem>>) attributes {dimension_semantics = [#tpu.dimension_semantics<parallel>, #tpu.dimension_semantics<parallel>], iteration_bounds = array<i64: 2, 2>, scalar_prefetch = 0 : i64, scratch_operands = 0 : i64, tpu.core_type = #tpu.core_type<tc>, window_params = [{transform_indices = @transform_0, window_bounds = array<i64: 1, 1, 8, 16>}, {transform_indices = @transform_1, window_bounds = array<i64: 1, 4, 128>}, {pipeline_mode = #tpu.pipeline_mode<synchronous>, transform_indices = @transform_2, window_bounds = array<i64: 9, 4, 1>}, {pipeline_mode = #tpu.pipeline_mode<synchronous>, transform_indices = @transform_3, window_bounds = array<i64: 4, 1>}, {pipeline_mode = #tpu.pipeline_mode<synchronous>, transform_indices = @transform_4, window_bounds = array<i64: 8, 4>}, {pipeline_mode = #tpu.pipeline_mode<synchronous>, transform_indices = @transform_5, window_bounds = array<i64: 8, 1>}, {transform_indices = @transform_6, window_bounds = array<i64: 1, 8, 128>}]} {
    %c0 = arith.constant 0 : index
    %c0_0 = arith.constant 0 : index
    %c0_1 = arith.constant 0 : index
    %0 = vector.load %arg4[%c0, %c0_0, %c0_1] : memref<9x4x1xf32, #tpu.memory_space<vmem>>, vector<9x4x1xf32>
    %c0_2 = arith.constant 0 : index
    %c0_3 = arith.constant 0 : index
    %1 = vector.load %arg5[%c0_2, %c0_3] : memref<4x1xf32, #tpu.memory_space<vmem>>, vector<4x1xf32>
    %c0_4 = arith.constant 0 : index
    %c0_5 = arith.constant 0 : index
    %2 = vector.load %arg6[%c0_4, %c0_5] : memref<8x4xf32, #tpu.memory_space<vmem>>, vector<8x4xf32>
    %c0_6 = arith.constant 0 : index
    %c0_7 = arith.constant 0 : index
    %3 = vector.load %arg7[%c0_6, %c0_7] : memref<8x1xf32, #tpu.memory_space<vmem>>, vector<8x1xf32>
    %c0_8 = arith.constant 0 : index
    %c0_9 = arith.constant 0 : index
    %c0_10 = arith.constant 0 : index
    %4 = vector.load %arg3[%c0_8, %c0_9, %c0_10] : memref<1x4x128xf32, #tpu.memory_space<vmem>>, vector<1x4x128xf32>
    %5 = vector.shape_cast %4 : vector<1x4x128xf32> to vector<4x128xf32>
    %6 = vector.extract_strided_slice %5 {offsets = [0, 112], sizes = [4, 16], strides = [1, 1]} : vector<4x128xf32> to vector<4x16xf32>
    %7 = vector.extract_strided_slice %5 {offsets = [0, 0], sizes = [4, 112], strides = [1, 1]} : vector<4x128xf32> to vector<4x112xf32>
    %8 = tpu.concatenate %6, %7 in 1 : vector<4x16xf32>, vector<4x112xf32> -> vector<4x128xf32>
    %9 = vector.extract_strided_slice %5 {offsets = [0, 16], sizes = [4, 112], strides = [1, 1]} : vector<4x128xf32> to vector<4x112xf32>
    %10 = vector.extract_strided_slice %5 {offsets = [0, 0], sizes = [4, 16], strides = [1, 1]} : vector<4x128xf32> to vector<4x16xf32>
    %11 = tpu.concatenate %9, %10 in 1 : vector<4x112xf32>, vector<4x16xf32> -> vector<4x128xf32>
    %12 = vector.extract_strided_slice %0 {offsets = [1, 0, 0], sizes = [1, 4, 1], strides = [1, 1, 1]} : vector<9x4x1xf32> to vector<1x4x1xf32>
    %13 = vector.shape_cast %12 : vector<1x4x1xf32> to vector<4x1xf32>
    %14 = vector.broadcast %13 : vector<4x1xf32> to vector<4x128xf32>
    %15 = arith.mulf %14, %8 : vector<4x128xf32>
    %16 = vector.extract_strided_slice %0 {offsets = [4, 0, 0], sizes = [1, 4, 1], strides = [1, 1, 1]} : vector<9x4x1xf32> to vector<1x4x1xf32>
    %17 = vector.shape_cast %16 : vector<1x4x1xf32> to vector<4x1xf32>
    %18 = vector.broadcast %17 : vector<4x1xf32> to vector<4x128xf32>
    %19 = arith.mulf %18, %5 : vector<4x128xf32>
    %20 = arith.addf %15, %19 : vector<4x128xf32>
    %21 = vector.extract_strided_slice %0 {offsets = [7, 0, 0], sizes = [1, 4, 1], strides = [1, 1, 1]} : vector<9x4x1xf32> to vector<1x4x1xf32>
    %22 = vector.shape_cast %21 : vector<1x4x1xf32> to vector<4x1xf32>
    %23 = vector.broadcast %22 : vector<4x1xf32> to vector<4x128xf32>
    %24 = arith.mulf %23, %11 : vector<4x128xf32>
    %25 = arith.addf %20, %24 : vector<4x128xf32>
    %26 = vector.extract_strided_slice %0 {offsets = [0, 0, 0], sizes = [1, 4, 1], strides = [1, 1, 1]} : vector<9x4x1xf32> to vector<1x4x1xf32>
    %27 = vector.shape_cast %26 : vector<1x4x1xf32> to vector<4x1xf32>
    %28 = vector.broadcast %27 : vector<4x1xf32> to vector<4x128xf32>
    %29 = arith.mulf %28, %8 : vector<4x128xf32>
    %30 = vector.extract_strided_slice %0 {offsets = [3, 0, 0], sizes = [1, 4, 1], strides = [1, 1, 1]} : vector<9x4x1xf32> to vector<1x4x1xf32>
    %31 = vector.shape_cast %30 : vector<1x4x1xf32> to vector<4x1xf32>
    %32 = vector.broadcast %31 : vector<4x1xf32> to vector<4x128xf32>
    %33 = arith.mulf %32, %5 : vector<4x128xf32>
    %34 = arith.addf %29, %33 : vector<4x128xf32>
    %35 = vector.extract_strided_slice %0 {offsets = [6, 0, 0], sizes = [1, 4, 1], strides = [1, 1, 1]} : vector<9x4x1xf32> to vector<1x4x1xf32>
    %36 = vector.shape_cast %35 : vector<1x4x1xf32> to vector<4x1xf32>
    %37 = vector.broadcast %36 : vector<4x1xf32> to vector<4x128xf32>
    %38 = arith.mulf %37, %11 : vector<4x128xf32>
    %39 = arith.addf %34, %38 : vector<4x128xf32>
    %40 = vector.extract_strided_slice %0 {offsets = [2, 0, 0], sizes = [1, 4, 1], strides = [1, 1, 1]} : vector<9x4x1xf32> to vector<1x4x1xf32>
    %41 = vector.shape_cast %40 : vector<1x4x1xf32> to vector<4x1xf32>
    %42 = vector.broadcast %41 : vector<4x1xf32> to vector<4x128xf32>
    %43 = arith.mulf %42, %8 : vector<4x128xf32>
    %44 = vector.extract_strided_slice %0 {offsets = [5, 0, 0], sizes = [1, 4, 1], strides = [1, 1, 1]} : vector<9x4x1xf32> to vector<1x4x1xf32>
    %45 = vector.shape_cast %44 : vector<1x4x1xf32> to vector<4x1xf32>
    %46 = vector.broadcast %45 : vector<4x1xf32> to vector<4x128xf32>
    %47 = arith.mulf %46, %5 : vector<4x128xf32>
    %48 = arith.addf %43, %47 : vector<4x128xf32>
    %49 = vector.extract_strided_slice %0 {offsets = [8, 0, 0], sizes = [1, 4, 1], strides = [1, 1, 1]} : vector<9x4x1xf32> to vector<1x4x1xf32>
    %50 = vector.shape_cast %49 : vector<1x4x1xf32> to vector<4x1xf32>
    %51 = vector.broadcast %50 : vector<4x1xf32> to vector<4x128xf32>
    %52 = arith.mulf %51, %11 : vector<4x128xf32>
    %53 = arith.addf %48, %52 : vector<4x128xf32>
    %54 = tpu.iota {dimensions = array<i32: 1>} : vector<1x128xi32>
    %c16_i32 = arith.constant 16 : i32
    %c0_i32 = arith.constant 0 : i32
    %55 = arith.cmpi eq, %c16_i32, %c0_i32 : i32
    %c1_i32 = arith.constant 1 : i32
    %56 = arith.select %55, %c1_i32, %c16_i32 : i32
    %57 = vector.broadcast %56 : i32 to vector<1x128xi32>
    %58 = arith.remsi %54, %57 : vector<1x128xi32>
    %c0_i32_11 = arith.constant 0 : i32
    %59 = vector.broadcast %c0_i32_11 : i32 to vector<1x128xi32>
    %60 = arith.cmpi ne, %58, %59 : vector<1x128xi32>
    %c0_i32_12 = arith.constant 0 : i32
    %61 = vector.broadcast %c0_i32_12 : i32 to vector<1x128xi32>
    %62 = arith.cmpi slt, %58, %61 : vector<1x128xi32>
    %c0_i32_13 = arith.constant 0 : i32
    %63 = arith.cmpi slt, %56, %c0_i32_13 : i32
    %64 = vector.broadcast %63 : i1 to vector<1x128xi1>
    %65 = vector.broadcast %64 : vector<1x128xi1> to vector<1x128xi1>
    %66 = arith.xori %62, %65 : vector<1x128xi1>
    %67 = arith.andi %66, %60 : vector<1x128xi1>
    %68 = vector.broadcast %56 : i32 to vector<1x128xi32>
    %69 = arith.addi %58, %68 : vector<1x128xi32>
    %70 = arith.select %67, %69, %58 : vector<1x128xi1>, vector<1x128xi32>
    %c0_i32_14 = arith.constant 0 : i32
    %71 = vector.broadcast %c0_i32_14 : i32 to vector<1x128xi32>
    %72 = arith.cmpi ne, %70, %71 : vector<1x128xi32>
    %73 = vector.extract_strided_slice %39 {offsets = [0, 127], sizes = [4, 1], strides = [1, 1]} : vector<4x128xf32> to vector<4x1xf32>
    %74 = vector.extract_strided_slice %39 {offsets = [0, 0], sizes = [4, 127], strides = [1, 1]} : vector<4x128xf32> to vector<4x127xf32>
    %75 = tpu.concatenate %73, %74 in 1 : vector<4x1xf32>, vector<4x127xf32> -> vector<4x128xf32>
    %cst = arith.constant 0.000000e+00 : f32
    %76 = vector.shape_cast %72 : vector<1x128xi1> to vector<1x128xi1>
    %77 = vector.broadcast %76 : vector<1x128xi1> to vector<4x128xi1>
    %78 = vector.broadcast %cst : f32 to vector<4x128xf32>
    %79 = arith.select %77, %75, %78 : vector<4x128xi1>, vector<4x128xf32>
    %80 = arith.addf %25, %79 : vector<4x128xf32>
    %c15_i32 = arith.constant 15 : i32
    %81 = vector.broadcast %c15_i32 : i32 to vector<1x128xi32>
    %82 = arith.cmpi ne, %70, %81 : vector<1x128xi32>
    %83 = vector.extract_strided_slice %53 {offsets = [0, 1], sizes = [4, 127], strides = [1, 1]} : vector<4x128xf32> to vector<4x127xf32>
    %84 = vector.extract_strided_slice %53 {offsets = [0, 0], sizes = [4, 1], strides = [1, 1]} : vector<4x128xf32> to vector<4x1xf32>
    %85 = tpu.concatenate %83, %84 in 1 : vector<4x127xf32>, vector<4x1xf32> -> vector<4x128xf32>
    %cst_15 = arith.constant 0.000000e+00 : f32
    %86 = vector.shape_cast %82 : vector<1x128xi1> to vector<1x128xi1>
    %87 = vector.broadcast %86 : vector<1x128xi1> to vector<4x128xi1>
    %88 = vector.broadcast %cst_15 : f32 to vector<4x128xf32>
    %89 = arith.select %87, %85, %88 : vector<4x128xi1>, vector<4x128xf32>
    %90 = arith.addf %80, %89 : vector<4x128xf32>
    %91 = vector.broadcast %1 : vector<4x1xf32> to vector<4x128xf32>
    %92 = arith.addf %90, %91 : vector<4x128xf32>
    %cst_16 = arith.constant 5.000000e-01 : f32
    %93 = vector.broadcast %cst_16 : f32 to vector<4x128xf32>
    %94 = arith.mulf %93, %92 : vector<4x128xf32>
    %cst_17 = arith.constant 0.707106769 : f32
    %95 = vector.broadcast %cst_17 : f32 to vector<4x128xf32>
    %96 = arith.mulf %92, %95 : vector<4x128xf32>
    %97 = math.erf %96 : vector<4x128xf32>
    %cst_18 = arith.constant 1.000000e+00 : f32
    %98 = vector.broadcast %cst_18 : f32 to vector<4x128xf32>
    %99 = arith.addf %98, %97 : vector<4x128xf32>
    %100 = arith.mulf %94, %99 : vector<4x128xf32>
    %101 = vector.extract_strided_slice %2 {offsets = [0, 0], sizes = [8, 1], strides = [1, 1]} : vector<8x4xf32> to vector<8x1xf32>
    %102 = vector.extract_strided_slice %100 {offsets = [0, 0], sizes = [1, 128], strides = [1, 1]} : vector<4x128xf32> to vector<1x128xf32>
    %103 = vector.broadcast %101 : vector<8x1xf32> to vector<8x128xf32>
    %104 = vector.broadcast %102 : vector<1x128xf32> to vector<8x128xf32>
    %105 = arith.mulf %103, %104 : vector<8x128xf32>
    %106 = vector.extract_strided_slice %2 {offsets = [0, 1], sizes = [8, 1], strides = [1, 1]} : vector<8x4xf32> to vector<8x1xf32>
    %107 = vector.extract_strided_slice %100 {offsets = [1, 0], sizes = [1, 128], strides = [1, 1]} : vector<4x128xf32> to vector<1x128xf32>
    %108 = vector.broadcast %106 : vector<8x1xf32> to vector<8x128xf32>
    %109 = vector.broadcast %107 : vector<1x128xf32> to vector<8x128xf32>
    %110 = arith.mulf %108, %109 : vector<8x128xf32>
    %111 = arith.addf %105, %110 : vector<8x128xf32>
    %112 = vector.extract_strided_slice %2 {offsets = [0, 2], sizes = [8, 1], strides = [1, 1]} : vector<8x4xf32> to vector<8x1xf32>
    %113 = vector.extract_strided_slice %100 {offsets = [2, 0], sizes = [1, 128], strides = [1, 1]} : vector<4x128xf32> to vector<1x128xf32>
    %114 = vector.broadcast %112 : vector<8x1xf32> to vector<8x128xf32>
    %115 = vector.broadcast %113 : vector<1x128xf32> to vector<8x128xf32>
    %116 = arith.mulf %114, %115 : vector<8x128xf32>
    %117 = arith.addf %111, %116 : vector<8x128xf32>
    %118 = vector.extract_strided_slice %2 {offsets = [0, 3], sizes = [8, 1], strides = [1, 1]} : vector<8x4xf32> to vector<8x1xf32>
    %119 = vector.extract_strided_slice %100 {offsets = [3, 0], sizes = [1, 128], strides = [1, 1]} : vector<4x128xf32> to vector<1x128xf32>
    %120 = vector.broadcast %118 : vector<8x1xf32> to vector<8x128xf32>
    %121 = vector.broadcast %119 : vector<1x128xf32> to vector<8x128xf32>
    %122 = arith.mulf %120, %121 : vector<8x128xf32>
    %123 = arith.addf %117, %122 : vector<8x128xf32>
    %124 = vector.broadcast %3 : vector<8x1xf32> to vector<8x128xf32>
    %125 = arith.addf %123, %124 : vector<8x128xf32>
    %cst_19 = arith.constant 5.000000e-01 : f32
    %126 = vector.broadcast %cst_19 : f32 to vector<8x128xf32>
    %127 = arith.mulf %126, %125 : vector<8x128xf32>
    %cst_20 = arith.constant 0.707106769 : f32
    %128 = vector.broadcast %cst_20 : f32 to vector<8x128xf32>
    %129 = arith.mulf %125, %128 : vector<8x128xf32>
    %130 = math.erf %129 : vector<8x128xf32>
    %cst_21 = arith.constant 1.000000e+00 : f32
    %131 = vector.broadcast %cst_21 : f32 to vector<8x128xf32>
    %132 = arith.addf %131, %130 : vector<8x128xf32>
    %133 = arith.mulf %127, %132 : vector<8x128xf32>
    %c0_22 = arith.constant 0 : index
    %c0_23 = arith.constant 0 : index
    %c0_24 = arith.constant 0 : index
    %134 = vector.load %arg8[%c0_22, %c0_23, %c0_24] : memref<1x8x128xf32, #tpu.memory_space<vmem>>, vector<1x8x128xf32>
    %135 = vector.shape_cast %134 : vector<1x8x128xf32> to vector<8x128xf32>
    %136 = vector.shape_cast %133 : vector<8x128xf32> to vector<1x8x128xf32>
    tpu.vector_store %arg8[%c0_22, %c0_23, %c0_24], %136 {strides = array<i32>} : memref<1x8x128xf32, #tpu.memory_space<vmem>>, vector<1x8x128xf32>,
    %c0_25 = arith.constant 0 : index
    %c0_26 = arith.constant 0 : index
    %c0_27 = arith.constant 0 : index
    %c0_28 = arith.constant 0 : index
    %137 = vector.load %arg2[%c0_25, %c0_26, %c0_27, %c0_28] : memref<1x1x8x16xf32, #tpu.memory_space<vmem>>, vector<1x1x8x16xf32>
    %138 = vector.shape_cast %137 : vector<1x1x8x16xf32> to vector<8x16xf32>
    %139 = vector.extract_strided_slice %138 {offsets = [0, 0], sizes = [4, 16], strides = [1, 1]} : vector<8x16xf32> to vector<4x16xf32>
    %140 = vector.extract_strided_slice %138 {offsets = [4, 0], sizes = [4, 16], strides = [1, 1]} : vector<8x16xf32> to vector<4x16xf32>
    %cst_29 = arith.constant 0.000000e+00 : f32
    %141 = vector.broadcast %cst_29 : f32 to vector<4x1xf32>
    %c0_30 = arith.constant 0 : index
    %c0_31 = arith.constant 0 : index
    %c0_32 = arith.constant 0 : index
    %142 = vector.load %arg3[%c0_30, %c0_31, %c0_32] : memref<1x4x128xf32, #tpu.memory_space<vmem>>, vector<1x4x16xf32>
    %143 = vector.shape_cast %142 : vector<1x4x16xf32> to vector<4x16xf32>
    %c0_33 = arith.constant 0 : index
    %c0_34 = arith.constant 0 : index
    %c16 = arith.constant 16 : index
    %144 = vector.load %arg3[%c0_33, %c0_34, %c16] : memref<1x4x128xf32, #tpu.memory_space<vmem>>, vector<1x4x16xf32>
    %145 = vector.shape_cast %144 : vector<1x4x16xf32> to vector<4x16xf32>
    %c0_35 = arith.constant 0 : index
    %c0_36 = arith.constant 0 : index
    %c112 = arith.constant 112 : index
    %146 = vector.load %arg3[%c0_35, %c0_36, %c112] : memref<1x4x128xf32, #tpu.memory_space<vmem>>, vector<1x4x16xf32>
    %147 = vector.shape_cast %146 : vector<1x4x16xf32> to vector<4x16xf32>
    %c0_37 = arith.constant 0 : index
    %c0_38 = arith.constant 0 : index
    %c96 = arith.constant 96 : index
    %148 = vector.load %arg3[%c0_37, %c0_38, %c96] : memref<1x4x128xf32, #tpu.memory_space<vmem>>, vector<1x4x16xf32>
    %149 = vector.shape_cast %148 : vector<1x4x16xf32> to vector<4x16xf32>
    %150 = vector.extract_strided_slice %0 {offsets = [1, 0, 0], sizes = [1, 4, 1], strides = [1, 1, 1]} : vector<9x4x1xf32> to vector<1x4x1xf32>
    %151 = vector.shape_cast %150 : vector<1x4x1xf32> to vector<4x1xf32>
    %152 = vector.broadcast %151 : vector<4x1xf32> to vector<4x16xf32>
    %153 = arith.mulf %152, %139 : vector<4x16xf32>
    %154 = vector.extract_strided_slice %0 {offsets = [4, 0, 0], sizes = [1, 4, 1], strides = [1, 1, 1]} : vector<9x4x1xf32> to vector<1x4x1xf32>
    %155 = vector.shape_cast %154 : vector<1x4x1xf32> to vector<4x1xf32>
    %156 = vector.broadcast %155 : vector<4x1xf32> to vector<4x16xf32>
    %157 = arith.mulf %156, %143 : vector<4x16xf32>
    %158 = arith.addf %153, %157 : vector<4x16xf32>
    %159 = vector.extract_strided_slice %0 {offsets = [7, 0, 0], sizes = [1, 4, 1], strides = [1, 1, 1]} : vector<9x4x1xf32> to vector<1x4x1xf32>
    %160 = vector.shape_cast %159 : vector<1x4x1xf32> to vector<4x1xf32>
    %161 = vector.broadcast %160 : vector<4x1xf32> to vector<4x16xf32>
    %162 = arith.mulf %161, %145 : vector<4x16xf32>
    %163 = arith.addf %158, %162 : vector<4x16xf32>
    %164 = vector.extract_strided_slice %0 {offsets = [0, 0, 0], sizes = [1, 4, 1], strides = [1, 1, 1]} : vector<9x4x1xf32> to vector<1x4x1xf32>
    %165 = vector.shape_cast %164 : vector<1x4x1xf32> to vector<4x1xf32>
    %166 = vector.broadcast %165 : vector<4x1xf32> to vector<4x16xf32>
    %167 = arith.mulf %166, %139 : vector<4x16xf32>
    %168 = vector.extract_strided_slice %0 {offsets = [3, 0, 0], sizes = [1, 4, 1], strides = [1, 1, 1]} : vector<9x4x1xf32> to vector<1x4x1xf32>
    %169 = vector.shape_cast %168 : vector<1x4x1xf32> to vector<4x1xf32>
    %170 = vector.broadcast %169 : vector<4x1xf32> to vector<4x16xf32>
    %171 = arith.mulf %170, %143 : vector<4x16xf32>
    %172 = arith.addf %167, %171 : vector<4x16xf32>
    %173 = vector.extract_strided_slice %0 {offsets = [6, 0, 0], sizes = [1, 4, 1], strides = [1, 1, 1]} : vector<9x4x1xf32> to vector<1x4x1xf32>
    %174 = vector.shape_cast %173 : vector<1x4x1xf32> to vector<4x1xf32>
    %175 = vector.broadcast %174 : vector<4x1xf32> to vector<4x16xf32>
    %176 = arith.mulf %175, %145 : vector<4x16xf32>
    %177 = arith.addf %172, %176 : vector<4x16xf32>
    %178 = vector.extract_strided_slice %0 {offsets = [2, 0, 0], sizes = [1, 4, 1], strides = [1, 1, 1]} : vector<9x4x1xf32> to vector<1x4x1xf32>
    %179 = vector.shape_cast %178 : vector<1x4x1xf32> to vector<4x1xf32>
    %180 = vector.broadcast %179 : vector<4x1xf32> to vector<4x16xf32>
    %181 = arith.mulf %180, %139 : vector<4x16xf32>
    %182 = vector.extract_strided_slice %0 {offsets = [5, 0, 0], sizes = [1, 4, 1], strides = [1, 1, 1]} : vector<9x4x1xf32> to vector<1x4x1xf32>
    %183 = vector.shape_cast %182 : vector<1x4x1xf32> to vector<4x1xf32>
    %184 = vector.broadcast %183 : vector<4x1xf32> to vector<4x16xf32>
    %185 = arith.mulf %184, %143 : vector<4x16xf32>
    %186 = arith.addf %181, %185 : vector<4x16xf32>
    %187 = vector.extract_strided_slice %0 {offsets = [8, 0, 0], sizes = [1, 4, 1], strides = [1, 1, 1]} : vector<9x4x1xf32> to vector<1x4x1xf32>
    %188 = vector.shape_cast %187 : vector<1x4x1xf32> to vector<4x1xf32>
    %189 = vector.broadcast %188 : vector<4x1xf32> to vector<4x16xf32>
    %190 = arith.mulf %189, %145 : vector<4x16xf32>
    %191 = arith.addf %186, %190 : vector<4x16xf32>
    %192 = vector.extract_strided_slice %177 {offsets = [0, 0], sizes = [4, 15], strides = [1, 1]} : vector<4x16xf32> to vector<4x15xf32>
    %193 = tpu.concatenate %141, %192 in 1 : vector<4x1xf32>, vector<4x15xf32> -> vector<4x16xf32>
    %194 = arith.addf %163, %193 : vector<4x16xf32>
    %195 = vector.extract_strided_slice %191 {offsets = [0, 1], sizes = [4, 15], strides = [1, 1]} : vector<4x16xf32> to vector<4x15xf32>
    %196 = tpu.concatenate %195, %141 in 1 : vector<4x15xf32>, vector<4x1xf32> -> vector<4x16xf32>
    %197 = arith.addf %194, %196 : vector<4x16xf32>
    %198 = vector.broadcast %1 : vector<4x1xf32> to vector<4x16xf32>
    %199 = arith.addf %197, %198 : vector<4x16xf32>
    %cst_39 = arith.constant 5.000000e-01 : f32
    %200 = vector.broadcast %cst_39 : f32 to vector<4x16xf32>
    %201 = arith.mulf %200, %199 : vector<4x16xf32>
    %cst_40 = arith.constant 0.707106769 : f32
    %202 = vector.broadcast %cst_40 : f32 to vector<4x16xf32>
    %203 = arith.mulf %199, %202 : vector<4x16xf32>
    %204 = math.erf %203 : vector<4x16xf32>
    %cst_41 = arith.constant 1.000000e+00 : f32
    %205 = vector.broadcast %cst_41 : f32 to vector<4x16xf32>
    %206 = arith.addf %205, %204 : vector<4x16xf32>
    %207 = arith.mulf %201, %206 : vector<4x16xf32>
    %208 = vector.extract_strided_slice %2 {offsets = [0, 0], sizes = [8, 1], strides = [1, 1]} : vector<8x4xf32> to vector<8x1xf32>
    %209 = vector.extract_strided_slice %207 {offsets = [0, 0], sizes = [1, 16], strides = [1, 1]} : vector<4x16xf32> to vector<1x16xf32>
    %210 = vector.broadcast %208 : vector<8x1xf32> to vector<8x16xf32>
    %211 = vector.broadcast %209 : vector<1x16xf32> to vector<8x16xf32>
    %212 = arith.mulf %210, %211 : vector<8x16xf32>
    %213 = vector.extract_strided_slice %2 {offsets = [0, 1], sizes = [8, 1], strides = [1, 1]} : vector<8x4xf32> to vector<8x1xf32>
    %214 = vector.extract_strided_slice %207 {offsets = [1, 0], sizes = [1, 16], strides = [1, 1]} : vector<4x16xf32> to vector<1x16xf32>
    %215 = vector.broadcast %213 : vector<8x1xf32> to vector<8x16xf32>
    %216 = vector.broadcast %214 : vector<1x16xf32> to vector<8x16xf32>
    %217 = arith.mulf %215, %216 : vector<8x16xf32>
    %218 = arith.addf %212, %217 : vector<8x16xf32>
    %219 = vector.extract_strided_slice %2 {offsets = [0, 2], sizes = [8, 1], strides = [1, 1]} : vector<8x4xf32> to vector<8x1xf32>
    %220 = vector.extract_strided_slice %207 {offsets = [2, 0], sizes = [1, 16], strides = [1, 1]} : vector<4x16xf32> to vector<1x16xf32>
    %221 = vector.broadcast %219 : vector<8x1xf32> to vector<8x16xf32>
    %222 = vector.broadcast %220 : vector<1x16xf32> to vector<8x16xf32>
    %223 = arith.mulf %221, %222 : vector<8x16xf32>
    %224 = arith.addf %218, %223 : vector<8x16xf32>
    %225 = vector.extract_strided_slice %2 {offsets = [0, 3], sizes = [8, 1], strides = [1, 1]} : vector<8x4xf32> to vector<8x1xf32>
    %226 = vector.extract_strided_slice %207 {offsets = [3, 0], sizes = [1, 16], strides = [1, 1]} : vector<4x16xf32> to vector<1x16xf32>
    %227 = vector.broadcast %225 : vector<8x1xf32> to vector<8x16xf32>
    %228 = vector.broadcast %226 : vector<1x16xf32> to vector<8x16xf32>
    %229 = arith.mulf %227, %228 : vector<8x16xf32>
    %230 = arith.addf %224, %229 : vector<8x16xf32>
    %231 = vector.broadcast %3 : vector<8x1xf32> to vector<8x16xf32>
    %232 = arith.addf %230, %231 : vector<8x16xf32>
    %cst_42 = arith.constant 5.000000e-01 : f32
    %233 = vector.broadcast %cst_42 : f32 to vector<8x16xf32>
    %234 = arith.mulf %233, %232 : vector<8x16xf32>
    %cst_43 = arith.constant 0.707106769 : f32
    %235 = vector.broadcast %cst_43 : f32 to vector<8x16xf32>
    %236 = arith.mulf %232, %235 : vector<8x16xf32>
    %237 = math.erf %236 : vector<8x16xf32>
    %cst_44 = arith.constant 1.000000e+00 : f32
    %238 = vector.broadcast %cst_44 : f32 to vector<8x16xf32>
    %239 = arith.addf %238, %237 : vector<8x16xf32>
    %240 = arith.mulf %234, %239 : vector<8x16xf32>
    %c0_45 = arith.constant 0 : index
    %c0_46 = arith.constant 0 : index
    %c0_47 = arith.constant 0 : index
    %241 = vector.load %arg8[%c0_45, %c0_46, %c0_47] : memref<1x8x128xf32, #tpu.memory_space<vmem>>, vector<1x8x16xf32>
    %242 = vector.shape_cast %241 : vector<1x8x16xf32> to vector<8x16xf32>
    %243 = vector.shape_cast %240 : vector<8x16xf32> to vector<1x8x16xf32>
    tpu.vector_store %arg8[%c0_45, %c0_46, %c0_47], %243 {strides = array<i32>} : memref<1x8x128xf32, #tpu.memory_space<vmem>>, vector<1x8x16xf32>,
    %244 = vector.extract_strided_slice %0 {offsets = [1, 0, 0], sizes = [1, 4, 1], strides = [1, 1, 1]} : vector<9x4x1xf32> to vector<1x4x1xf32>
    %245 = vector.shape_cast %244 : vector<1x4x1xf32> to vector<4x1xf32>
    %246 = vector.broadcast %245 : vector<4x1xf32> to vector<4x16xf32>
    %247 = arith.mulf %246, %149 : vector<4x16xf32>
    %248 = vector.extract_strided_slice %0 {offsets = [4, 0, 0], sizes = [1, 4, 1], strides = [1, 1, 1]} : vector<9x4x1xf32> to vector<1x4x1xf32>
    %249 = vector.shape_cast %248 : vector<1x4x1xf32> to vector<4x1xf32>
    %250 = vector.broadcast %249 : vector<4x1xf32> to vector<4x16xf32>
    %251 = arith.mulf %250, %147 : vector<4x16xf32>
    %252 = arith.addf %247, %251 : vector<4x16xf32>
    %253 = vector.extract_strided_slice %0 {offsets = [7, 0, 0], sizes = [1, 4, 1], strides = [1, 1, 1]} : vector<9x4x1xf32> to vector<1x4x1xf32>
    %254 = vector.shape_cast %253 : vector<1x4x1xf32> to vector<4x1xf32>
    %255 = vector.broadcast %254 : vector<4x1xf32> to vector<4x16xf32>
    %256 = arith.mulf %255, %140 : vector<4x16xf32>
    %257 = arith.addf %252, %256 : vector<4x16xf32>
    %258 = vector.extract_strided_slice %0 {offsets = [0, 0, 0], sizes = [1, 4, 1], strides = [1, 1, 1]} : vector<9x4x1xf32> to vector<1x4x1xf32>
    %259 = vector.shape_cast %258 : vector<1x4x1xf32> to vector<4x1xf32>
    %260 = vector.broadcast %259 : vector<4x1xf32> to vector<4x16xf32>
    %261 = arith.mulf %260, %149 : vector<4x16xf32>
    %262 = vector.extract_strided_slice %0 {offsets = [3, 0, 0], sizes = [1, 4, 1], strides = [1, 1, 1]} : vector<9x4x1xf32> to vector<1x4x1xf32>
    %263 = vector.shape_cast %262 : vector<1x4x1xf32> to vector<4x1xf32>
    %264 = vector.broadcast %263 : vector<4x1xf32> to vector<4x16xf32>
    %265 = arith.mulf %264, %147 : vector<4x16xf32>
    %266 = arith.addf %261, %265 : vector<4x16xf32>
    %267 = vector.extract_strided_slice %0 {offsets = [6, 0, 0], sizes = [1, 4, 1], strides = [1, 1, 1]} : vector<9x4x1xf32> to vector<1x4x1xf32>
    %268 = vector.shape_cast %267 : vector<1x4x1xf32> to vector<4x1xf32>
    %269 = vector.broadcast %268 : vector<4x1xf32> to vector<4x16xf32>
    %270 = arith.mulf %269, %140 : vector<4x16xf32>
    %271 = arith.addf %266, %270 : vector<4x16xf32>
    %272 = vector.extract_strided_slice %0 {offsets = [2, 0, 0], sizes = [1, 4, 1], strides = [1, 1, 1]} : vector<9x4x1xf32> to vector<1x4x1xf32>
    %273 = vector.shape_cast %272 : vector<1x4x1xf32> to vector<4x1xf32>
    %274 = vector.broadcast %273 : vector<4x1xf32> to vector<4x16xf32>
    %275 = arith.mulf %274, %149 : vector<4x16xf32>
    %276 = vector.extract_strided_slice %0 {offsets = [5, 0, 0], sizes = [1, 4, 1], strides = [1, 1, 1]} : vector<9x4x1xf32> to vector<1x4x1xf32>
    %277 = vector.shape_cast %276 : vector<1x4x1xf32> to vector<4x1xf32>
    %278 = vector.broadcast %277 : vector<4x1xf32> to vector<4x16xf32>
    %279 = arith.mulf %278, %147 : vector<4x16xf32>
    %280 = arith.addf %275, %279 : vector<4x16xf32>
    %281 = vector.extract_strided_slice %0 {offsets = [8, 0, 0], sizes = [1, 4, 1], strides = [1, 1, 1]} : vector<9x4x1xf32> to vector<1x4x1xf32>
    %282 = vector.shape_cast %281 : vector<1x4x1xf32> to vector<4x1xf32>
    %283 = vector.broadcast %282 : vector<4x1xf32> to vector<4x16xf32>
    %284 = arith.mulf %283, %140 : vector<4x16xf32>
    %285 = arith.addf %280, %284 : vector<4x16xf32>
    %286 = vector.extract_strided_slice %271 {offsets = [0, 0], sizes = [4, 15], strides = [1, 1]} : vector<4x16xf32> to vector<4x15xf32>
    %287 = tpu.concatenate %141, %286 in 1 : vector<4x1xf32>, vector<4x15xf32> -> vector<4x16xf32>
    %288 = arith.addf %257, %287 : vector<4x16xf32>
    %289 = vector.extract_strided_slice %285 {offsets = [0, 1], sizes = [4, 15], strides = [1, 1]} : vector<4x16xf32> to vector<4x15xf32>
    %290 = tpu.concatenate %289, %141 in 1 : vector<4x15xf32>, vector<4x1xf32> -> vector<4x16xf32>
    %291 = arith.addf %288, %290 : vector<4x16xf32>
    %292 = vector.broadcast %1 : vector<4x1xf32> to vector<4x16xf32>
    %293 = arith.addf %291, %292 : vector<4x16xf32>
    %cst_48 = arith.constant 5.000000e-01 : f32
    %294 = vector.broadcast %cst_48 : f32 to vector<4x16xf32>
    %295 = arith.mulf %294, %293 : vector<4x16xf32>
    %cst_49 = arith.constant 0.707106769 : f32
    %296 = vector.broadcast %cst_49 : f32 to vector<4x16xf32>
    %297 = arith.mulf %293, %296 : vector<4x16xf32>
    %298 = math.erf %297 : vector<4x16xf32>
    %cst_50 = arith.constant 1.000000e+00 : f32
    %299 = vector.broadcast %cst_50 : f32 to vector<4x16xf32>
    %300 = arith.addf %299, %298 : vector<4x16xf32>
    %301 = arith.mulf %295, %300 : vector<4x16xf32>
    %302 = vector.extract_strided_slice %2 {offsets = [0, 0], sizes = [8, 1], strides = [1, 1]} : vector<8x4xf32> to vector<8x1xf32>
    %303 = vector.extract_strided_slice %301 {offsets = [0, 0], sizes = [1, 16], strides = [1, 1]} : vector<4x16xf32> to vector<1x16xf32>
    %304 = vector.broadcast %302 : vector<8x1xf32> to vector<8x16xf32>
    %305 = vector.broadcast %303 : vector<1x16xf32> to vector<8x16xf32>
    %306 = arith.mulf %304, %305 : vector<8x16xf32>
    %307 = vector.extract_strided_slice %2 {offsets = [0, 1], sizes = [8, 1], strides = [1, 1]} : vector<8x4xf32> to vector<8x1xf32>
    %308 = vector.extract_strided_slice %301 {offsets = [1, 0], sizes = [1, 16], strides = [1, 1]} : vector<4x16xf32> to vector<1x16xf32>
    %309 = vector.broadcast %307 : vector<8x1xf32> to vector<8x16xf32>
    %310 = vector.broadcast %308 : vector<1x16xf32> to vector<8x16xf32>
    %311 = arith.mulf %309, %310 : vector<8x16xf32>
    %312 = arith.addf %306, %311 : vector<8x16xf32>
    %313 = vector.extract_strided_slice %2 {offsets = [0, 2], sizes = [8, 1], strides = [1, 1]} : vector<8x4xf32> to vector<8x1xf32>
    %314 = vector.extract_strided_slice %301 {offsets = [2, 0], sizes = [1, 16], strides = [1, 1]} : vector<4x16xf32> to vector<1x16xf32>
    %315 = vector.broadcast %313 : vector<8x1xf32> to vector<8x16xf32>
    %316 = vector.broadcast %314 : vector<1x16xf32> to vector<8x16xf32>
    %317 = arith.mulf %315, %316 : vector<8x16xf32>
    %318 = arith.addf %312, %317 : vector<8x16xf32>
    %319 = vector.extract_strided_slice %2 {offsets = [0, 3], sizes = [8, 1], strides = [1, 1]} : vector<8x4xf32> to vector<8x1xf32>
    %320 = vector.extract_strided_slice %301 {offsets = [3, 0], sizes = [1, 16], strides = [1, 1]} : vector<4x16xf32> to vector<1x16xf32>
    %321 = vector.broadcast %319 : vector<8x1xf32> to vector<8x16xf32>
    %322 = vector.broadcast %320 : vector<1x16xf32> to vector<8x16xf32>
    %323 = arith.mulf %321, %322 : vector<8x16xf32>
    %324 = arith.addf %318, %323 : vector<8x16xf32>
    %325 = vector.broadcast %3 : vector<8x1xf32> to vector<8x16xf32>
    %326 = arith.addf %324, %325 : vector<8x16xf32>
    %cst_51 = arith.constant 5.000000e-01 : f32
    %327 = vector.broadcast %cst_51 : f32 to vector<8x16xf32>
    %328 = arith.mulf %327, %326 : vector<8x16xf32>
    %cst_52 = arith.constant 0.707106769 : f32
    %329 = vector.broadcast %cst_52 : f32 to vector<8x16xf32>
    %330 = arith.mulf %326, %329 : vector<8x16xf32>
    %331 = math.erf %330 : vector<8x16xf32>
    %cst_53 = arith.constant 1.000000e+00 : f32
    %332 = vector.broadcast %cst_53 : f32 to vector<8x16xf32>
    %333 = arith.addf %332, %331 : vector<8x16xf32>
    %334 = arith.mulf %328, %333 : vector<8x16xf32>
    %c0_54 = arith.constant 0 : index
    %c0_55 = arith.constant 0 : index
    %c112_56 = arith.constant 112 : index
    %335 = vector.load %arg8[%c0_54, %c0_55, %c112_56] : memref<1x8x128xf32, #tpu.memory_space<vmem>>, vector<1x8x16xf32>
    %336 = vector.shape_cast %335 : vector<1x8x16xf32> to vector<8x16xf32>
    %337 = vector.shape_cast %334 : vector<8x16xf32> to vector<1x8x16xf32>
    tpu.vector_store %arg8[%c0_54, %c0_55, %c112_56], %337 {strides = array<i32>} : memref<1x8x128xf32, #tpu.memory_space<vmem>>, vector<1x8x16xf32>,
    return
  }
  func.func @transform_0(%arg0: i32, %arg1: i32) -> (i32, i32, i32, i32) {
    %c0_i32 = arith.constant 0 : i32
    %c0_i32_0 = arith.constant 0 : i32
    %c0_i32_1 = arith.constant 0 : i32
    return %arg0, %arg1, %c0_i32, %c0_i32_0 : i32, i32, i32, i32
  }
  func.func @transform_1(%arg0: i32, %arg1: i32) -> (i32, i32, i32) {
    %c0_i32 = arith.constant 0 : i32
    %c0_i32_0 = arith.constant 0 : i32
    return %arg0, %c0_i32, %arg1 : i32, i32, i32
  }
  func.func @transform_2(%arg0: i32, %arg1: i32) -> (i32, i32, i32) {
    %c0_i32 = arith.constant 0 : i32
    %c0_i32_0 = arith.constant 0 : i32
    %c0_i32_1 = arith.constant 0 : i32
    %c0_i32_2 = arith.constant 0 : i32
    return %c0_i32, %c0_i32_0, %c0_i32_1 : i32, i32, i32
  }
  func.func @transform_3(%arg0: i32, %arg1: i32) -> (i32, i32) {
    %c0_i32 = arith.constant 0 : i32
    %c0_i32_0 = arith.constant 0 : i32
    %c0_i32_1 = arith.constant 0 : i32
    return %c0_i32, %c0_i32_0 : i32, i32
  }
  func.func @transform_4(%arg0: i32, %arg1: i32) -> (i32, i32) {
    %c0_i32 = arith.constant 0 : i32
    %c0_i32_0 = arith.constant 0 : i32
    %c0_i32_1 = arith.constant 0 : i32
    return %c0_i32, %c0_i32_0 : i32, i32
  }
  func.func @transform_5(%arg0: i32, %arg1: i32) -> (i32, i32) {
    %c0_i32 = arith.constant 0 : i32
    %c0_i32_0 = arith.constant 0 : i32
    %c0_i32_1 = arith.constant 0 : i32
    return %c0_i32, %c0_i32_0 : i32, i32
  }
  func.func @transform_6(%arg0: i32, %arg1: i32) -> (i32, i32, i32) {
    %c0_i32 = arith.constant 0 : i32
    %c0_i32_0 = arith.constant 0 : i32
    return %arg0, %c0_i32, %arg1 : i32, i32, i32
  }
}

</mosaic_0001>

<llo_original>
// kernel: tpu_custom_call.1
$region0: #{tpu_custom_call.1}
  #allocation0 [shape = 'u32[]', space=smem, size = 0x4, offset = 0x4, fixed_abs, tag = 'smem constant byte address 0x4 - core index']
  #allocation1 [shape = 'u32[144,128]{1,0:T(1,128)}', space=vmem, size = 0x12000, scoped, tag = 'internal scratch']
  %s0 = inlined_call_operand.vmem [shape: f32[2,2,8,16], index: 0, kind: input, shape index: {}]
  %s1 = inlined_call_operand.vmem [shape: f32[2,4,256], index: 1, kind: input, shape index: {}]
  %s2 = inlined_call_operand.vmem [shape: f32[9,4,1], index: 2, kind: input, shape index: {}]
  %s3 = inlined_call_operand.vmem [shape: f32[4,1], index: 3, kind: input, shape index: {}]
  %s4 = inlined_call_operand.vmem [shape: f32[8,4], index: 4, kind: input, shape index: {}]
  %s5 = inlined_call_operand.vmem [shape: f32[8,1], index: 5, kind: input, shape index: {}]
  %s6 = inlined_call_operand.hbm [shape: f32[2,8,256], index: 6, kind: output, shape index: {}]
  %s7 = sld [smem:[#allocation0]]
  $region57: #{tpu_custom_call.1} parent=0
    _
  %s9 = ssub.s32 1, %s7
  %s10 = scalar_select 0, %s9, %s7
  $region1: #{tpu_custom_call.1} parent=0
    #allocation2 [shape = 'u8[8192]{0}', space=vmem, size = 0x2000, scoped, tag = 'output window, operand 0']
    #allocation3 [shape = 's32[2]{0}', space=sflag, size = 0x8, scoped, tag = 'scoped memory for tpu_custom_call.1']
    %11 = vsyncpa [#allocation3], 0
    %s12 = scalar_lea.sflag [#allocation3], 1
    %13 = vsyncpa %s12, 0
    loop: start=0, step=1, limit=6
    $region2: #{tpu_custom_call.1} parent=1 // loop_pre_header
      _
    $region3: #{tpu_custom_call.1} parent=1 // loop_header
      %s15 = sphi 0, %s19
      %p16 = scmp.ge.s32.totalorder %s15, 6
      %s22 = sphi 0, %s34
      %s23 = sphi 0, %s30
      %s24 = sphi 0, %s22
      %s25 = sphi 0, %s23
      %s26 = sphi 0, %s24
      %s27 = sphi 0, %s25
      %s39 = sphi 0, %s41
      %s42 = sphi 0, %s39
      %s43 = sphi 0, %s42
      %s59 = sphi 0, %s43
      %s67 = sphi 0, %s69
      %s70 = sphi 0, %s67
      %s71 = sphi 0, %s70
      %s87 = sphi 0, %s71
      %s91 = sphi 0, %s91
      %s93 = sphi 0, %s91
      %s94 = sphi 0, %s93
      %s108 = sphi 0, %s94
      %s112 = sphi 0, %s112
      %s114 = sphi 0, %s112
      %s115 = sphi 0, %s114
      %s129 = sphi 0, %s115
      %s133 = sphi 0, %s133
      %s135 = sphi 0, %s133
      %s136 = sphi 0, %s135
      %s150 = sphi 0, %s136
      %s154 = sphi 0, %s154
      %s156 = sphi 0, %s154
      %s157 = sphi 0, %s156
      %s171 = sphi 0, %s157
      %s179 = sphi 0, %s181
      %s182 = sphi 0, %s179
      %s183 = sphi 0, %s182
      %s199 = sphi 0, %s183
    $region4: #{tpu_custom_call.1} parent=1 // loop_header_branch
      %18 = sbr.rel (%p16) target = $region8
    $region5: #{tpu_custom_call.1} parent=1 // loop_body
      %s20 = ssub.s32 %s15, 1
      %s21 = ssub.s32 %s15, 2
      %s28 = sadd.s32 1, %s23
      %p29 = scmp.ge.s32.totalorder %s28, 2
      %s30 = scalar_select %p29, 0, %s28
      %s31 = sadd.s32 1, %s22
      %s32 = scalar_select %p29, %s31, %s22
      %p33 = scmp.ge.s32.totalorder %s32, 2
      %s34 = scalar_select %p33, 0, %s32
      %s35 = ssub.s32 %s22, %s34
      %s36 = ssub.s32 %s23, %s30
      %s37 = sor.u32 %s35, %s36
      %p38 = scmp.eq.s32.totalorder %s37, 0
      %s40 = sadd.s32 %s39, 1
      %s41 = scalar_select %p38, %s39, %s40
      %p44 = pneg %p38
      %p45 = scmp.eq.s32.totalorder %s15, 3
      %p46 = por %p44, %p45
      %p47 = scmp.ne.s32.totalorder %s39, %s42
      %p48 = scmp.eq.s32.totalorder %s15, 0
      %p49 = por %p47, %p48
      %p50 = scmp.ne.s32.totalorder %s39, %s42
      %p51 = scmp.eq.s32.totalorder %s20, 3
      %p52 = por %p50, %p51
      %p53 = scmp.ne.s32.totalorder %s42, %s43
      %p54 = scmp.eq.s32.totalorder %s20, 0
      %p55 = por %p53, %p54
      %p56 = scmp.ne.s32.totalorder %s42, %s43
      %p57 = scmp.eq.s32.totalorder %s21, 3
      %p58 = por %p56, %p57
      %p60 = scmp.ne.s32.totalorder %s43, %s59
      %p61 = scmp.eq.s32.totalorder %s21, 0
      %p62 = por %p60, %p61
      %s63 = ssub.s32 %s22, %s34
      %s64 = ssub.s32 %s23, %s30
      %s65 = sor.u32 %s63, %s64
      %p66 = scmp.eq.s32.totalorder %s65, 0
      %s68 = sadd.s32 %s67, 1
      %s69 = scalar_select %p66, %s67, %s68
      %p72 = pneg %p66
      %p73 = scmp.eq.s32.totalorder %s15, 3
      %p74 = por %p72, %p73
      %p75 = scmp.ne.s32.totalorder %s67, %s70
      %p76 = scmp.eq.s32.totalorder %s15, 0
      %p77 = por %p75, %p76
      %p78 = scmp.ne.s32.totalorder %s67, %s70
      %p79 = scmp.eq.s32.totalorder %s20, 3
      %p80 = por %p78, %p79
      %p81 = scmp.ne.s32.totalorder %s70, %s71
      %p82 = scmp.eq.s32.totalorder %s20, 0
      %p83 = por %p81, %p82
      %p84 = scmp.ne.s32.totalorder %s70, %s71
      %p85 = scmp.eq.s32.totalorder %s21, 3
      %p86 = por %p84, %p85
      %p88 = scmp.ne.s32.totalorder %s71, %s87
      %p89 = scmp.eq.s32.totalorder %s21, 0
      %p90 = por %p88, %p89
      %s92 = sadd.s32 %s91, 1
      %p95 = scmp.eq.s32.totalorder %s15, 3
      %p96 = scmp.ne.s32.totalorder %s91, %s93
      %p97 = scmp.eq.s32.totalorder %s15, 0
      %p98 = por %p96, %p97
      %p99 = scmp.ne.s32.totalorder %s91, %s93
      %p100 = scmp.eq.s32.totalorder %s20, 3
      %p101 = por %p99, %p100
      %p102 = scmp.ne.s32.totalorder %s93, %s94
      %p103 = scmp.eq.s32.totalorder %s20, 0
      %p104 = por %p102, %p103
      %p105 = scmp.ne.s32.totalorder %s93, %s94
      %p106 = scmp.eq.s32.totalorder %s21, 3
      %p107 = por %p105, %p106
      %p109 = scmp.ne.s32.totalorder %s94, %s108
      %p110 = scmp.eq.s32.totalorder %s21, 0
      %p111 = por %p109, %p110
      %s113 = sadd.s32 %s112, 1
      %p116 = scmp.eq.s32.totalorder %s15, 3
      %p117 = scmp.ne.s32.totalorder %s112, %s114
      %p118 = scmp.eq.s32.totalorder %s15, 0
      %p119 = por %p117, %p118
      %p120 = scmp.ne.s32.totalorder %s112, %s114
      %p121 = scmp.eq.s32.totalorder %s20, 3
      %p122 = por %p120, %p121
      %p123 = scmp.ne.s32.totalorder %s114, %s115
      %p124 = scmp.eq.s32.totalorder %s20, 0
      %p125 = por %p123, %p124
      %p126 = scmp.ne.s32.totalorder %s114, %s115
      %p127 = scmp.eq.s32.totalorder %s21, 3
      %p128 = por %p126, %p127
      %p130 = scmp.ne.s32.totalorder %s115, %s129
      %p131 = scmp.eq.s32.totalorder %s21, 0
      %p132 = por %p130, %p131
      %s134 = sadd.s32 %s133, 1
      %p137 = scmp.eq.s32.totalorder %s15, 3
      %p138 = scmp.ne.s32.totalorder %s133, %s135
      %p139 = scmp.eq.s32.totalorder %s15, 0
      %p140 = por %p138, %p139
      %p141 = scmp.ne.s32.totalorder %s133, %s135
      %p142 = scmp.eq.s32.totalorder %s20, 3
      %p143 = por %p141, %p142
      %p144 = scmp.ne.s32.totalorder %s135, %s136
      %p145 = scmp.eq.s32.totalorder %s20, 0
      %p146 = por %p144, %p145
      %p147 = scmp.ne.s32.totalorder %s135, %s136
      %p148 = scmp.eq.s32.totalorder %s21, 3
      %p149 = por %p147, %p148
      %p151 = scmp.ne.s32.totalorder %s136, %s150
      %p152 = scmp.eq.s32.totalorder %s21, 0
      %p153 = por %p151, %p152
      %s155 = sadd.s32 %s154, 1
      %p158 = scmp.eq.s32.totalorder %s15, 3
      %p159 = scmp.ne.s32.totalorder %s154, %s156
      %p160 = scmp.eq.s32.totalorder %s15, 0
      %p161 = por %p159, %p160
      %p162 = scmp.ne.s32.totalorder %s154, %s156
      %p163 = scmp.eq.s32.totalorder %s20, 3
      %p164 = por %p162, %p163
      %p165 = scmp.ne.s32.totalorder %s156, %s157
      %p166 = scmp.eq.s32.totalorder %s20, 0
      %p167 = por %p165, %p166
      %p168 = scmp.ne.s32.totalorder %s156, %s157
      %p169 = scmp.eq.s32.totalorder %s21, 3
      %p170 = por %p168, %p169
      %p172 = scmp.ne.s32.totalorder %s157, %s171
      %p173 = scmp.eq.s32.totalorder %s21, 0
      %p174 = por %p172, %p173
      %s175 = ssub.s32 %s22, %s34
      %s176 = ssub.s32 %s23, %s30
      %s177 = sor.u32 %s175, %s176
      %p178 = scmp.eq.s32.totalorder %s177, 0
      %s180 = sadd.s32 %s179, 1
      %s181 = scalar_select %p178, %s179, %s180
      %p184 = pneg %p178
      %p185 = scmp.eq.s32.totalorder %s15, 3
      %p186 = por %p184, %p185
      %p187 = scmp.ne.s32.totalorder %s179, %s182
      %p188 = scmp.eq.s32.totalorder %s15, 0
      %p189 = por %p187, %p188
      %p190 = scmp.ne.s32.totalorder %s179, %s182
      %p191 = scmp.eq.s32.totalorder %s20, 3
      %p192 = por %p190, %p191
      %p193 = scmp.ne.s32.totalorder %s182, %s183
      %p194 = scmp.eq.s32.totalorder %s20, 0
      %p195 = por %p193, %p194
      %p196 = scmp.ne.s32.totalorder %s182, %s183
      %p197 = scmp.eq.s32.totalorder %s21, 3
      %p198 = por %p196, %p197
      %p200 = scmp.ne.s32.totalorder %s183, %s199
      %p201 = scmp.eq.s32.totalorder %s21, 0
      %p202 = por %p200, %p201
      %p203 = scmp.le.s32.totalorder 1, %s15
      %p204 = scmp.lt.s32.totalorder %s15, 5
      %p205 = pnand %p203, %p204
      %p206 = pneg %p205
      // Predicated region
      $region9: #{tpu_custom_call.1} parent=5 // pred_check
        _
      $region10: #{tpu_custom_call.1} parent=5 // pred_check_branch
        %208 = sbr.rel (%p205) target = $region12
      $region11: #{tpu_custom_call.1} parent=5 // pred_region
        %s209 = ssub.s32 %s15, 1
        // Predicated region
        $region13: #{tpu_custom_call.1} parent=11 // pred_check
          %p210 = pneg %p104
        $region14: #{tpu_custom_call.1} parent=11 // pred_check_branch
          %212 = sbr.rel (%p210) target = $region16
        $region15: #{tpu_custom_call.1} parent=11 // pred_region
          _
        $region16: #{tpu_custom_call.1} parent=11 // pred_fallthru
          _
        // Predicated region
        $region17: #{tpu_custom_call.1} parent=11 // pred_check
          %p213 = pneg %p125
        $region18: #{tpu_custom_call.1} parent=11 // pred_check_branch
          %215 = sbr.rel (%p213) target = $region20
        $region19: #{tpu_custom_call.1} parent=11 // pred_region
          _
        $region20: #{tpu_custom_call.1} parent=11 // pred_fallthru
          _
        // Predicated region
        $region21: #{tpu_custom_call.1} parent=11 // pred_check
          %p216 = pneg %p146
        $region22: #{tpu_custom_call.1} parent=11 // pred_check_branch
          %218 = sbr.rel (%p216) target = $region24
        $region23: #{tpu_custom_call.1} parent=11 // pred_region
          _
        $region24: #{tpu_custom_call.1} parent=11 // pred_fallthru
          _
        // Predicated region
        $region25: #{tpu_custom_call.1} parent=11 // pred_check
          %p219 = pneg %p167
        $region26: #{tpu_custom_call.1} parent=11 // pred_check_branch
          %221 = sbr.rel (%p219) target = $region28
        $region27: #{tpu_custom_call.1} parent=11 // pred_region
          _
        $region28: #{tpu_custom_call.1} parent=11 // pred_fallthru
          _
      $region12: #{tpu_custom_call.1} parent=5 // pred_fallthru
        _
      %p222 = scmp.lt.s32.totalorder %s15, 4
      // Predicated region
      $region29: #{tpu_custom_call.1} parent=5 // pred_check
        %p223 = pneg %p222
      $region30: #{tpu_custom_call.1} parent=5 // pred_check_branch
        %225 = sbr.rel (%p223) target = $region32
      $region31: #{tpu_custom_call.1} parent=5 // pred_region
        // Predicated region
        $region33: #{tpu_custom_call.1} parent=31 // pred_check
          %p226 = pneg %p49
        $region34: #{tpu_custom_call.1} parent=31 // pred_check_branch
          %228 = sbr.rel (%p226) target = $region36
        $region35: #{tpu_custom_call.1} parent=31 // pred_region
          %p229 = scmp.lt.s32.totalorder %s22, 1
          %s230 = scalar_select %p229, %s22, 1
          %p231 = scmp.lt.s32.totalorder %s23, 1
          %s232 = scalar_select %p231, %s23, 1
          %s233 = smul.addr %s230, 2
          %s234 = sadd.s32 %s232, %s233
          %s235 = smul.addr %s234, 8
          %s236 = scalar_lea.vmem %s0, %s235
        $region36: #{tpu_custom_call.1} parent=31 // pred_fallthru
          _
        // Predicated region
        $region37: #{tpu_custom_call.1} parent=31 // pred_check
          %p237 = pneg %p77
        $region38: #{tpu_custom_call.1} parent=31 // pred_check_branch
          %239 = sbr.rel (%p237) target = $region40
        $region39: #{tpu_custom_call.1} parent=31 // pred_region
          %p240 = scmp.lt.s32.totalorder %s22, 1
          %s241 = scalar_select %p240, %s22, 1
          %p242 = scmp.lt.s32.totalorder %s23, 1
          %s243 = scalar_select %p242, %s23, 1
          %s244 = smul.addr %s241, 2
          %s245 = sadd.s32 %s243, %s244
          %s246 = smul.addr %s245, 4
          %s247 = scalar_lea.vmem %s1, %s246
        $region40: #{tpu_custom_call.1} parent=31 // pred_fallthru
          _
      $region32: #{tpu_custom_call.1} parent=5 // pred_fallthru
        _
      %p248 = scmp.le.s32.totalorder 1, %s15
      %p249 = scmp.lt.s32.totalorder %s15, 5
      %p250 = pnand %p248, %p249
      %p251 = pneg %p250
      // Predicated region
      $region41: #{tpu_custom_call.1} parent=5 // pred_check
        _
      $region42: #{tpu_custom_call.1} parent=5 // pred_check_branch
        %253 = sbr.rel (%p250) target = $region44
      $region43: #{tpu_custom_call.1} parent=5 // pred_region
        %s254 = ssub.s32 %s15, 1
        %p255 = scmp.lt.s32.totalorder %s24, 1
        %s256 = scalar_select %p255, %s24, 1
        %p257 = scmp.lt.s32.totalorder %s25, 1
        %s258 = scalar_select %p257, %s25, 1
        %s259 = smul.addr %s256, 2
        %s260 = sadd.s32 %s258, %s259
        %s261 = smul.addr %s260, 8
        %s262 = scalar_lea.vmem %s0, %s261
        %p263 = pneg %p55
        %p264 = pneg %p52
        %p265 = scmp.lt.s32.totalorder %s24, 1
        %s266 = scalar_select %p265, %s24, 1
        %p267 = scmp.lt.s32.totalorder %s25, 1
        %s268 = scalar_select %p267, %s25, 1
        %s269 = smul.addr %s266, 2
        %s270 = sadd.s32 %s268, %s269
        %s271 = smul.addr %s270, 4
        %s272 = scalar_lea.vmem %s1, %s271
        %p273 = pneg %p83
        %p274 = pneg %p80
        %p275 = pneg %p104
        %p276 = pneg %p101
        %p277 = pneg %p125
        %p278 = pneg %p122
        %p279 = pneg %p146
        %p280 = pneg %p143
        %p281 = pneg %p167
        %p282 = pneg %p164
        %p283 = pneg %p195
        %p284 = pneg %p192
        %s285 = sand.u32 %s182, 1
        %s286 = scalar_lea.sflag [#allocation3], %s285
        %s287 = sand.u32 %s182, 1
        %s288 = smul.addr %s287, 8
        %s289 = scalar_lea.vmem [#allocation2], %s288
        %p290 = scmp.lt.s32.totalorder %s24, 1
        %s291 = scalar_select %p290, %s24, 1
        %p292 = scmp.lt.s32.totalorder %s25, 1
        %s293 = scalar_select %p292, %s25, 1
        %s294 = smul.addr %s291, 2
        %s295 = sadd.s32 %s293, %s294
        %s296 = smul.addr %s295, 8
        %s297 = scalar_lea.vmem %s0, %s296
        %p298 = scmp.lt.s32.totalorder %s24, 1
        %s299 = scalar_select %p298, %s24, 1
        %p300 = scmp.lt.s32.totalorder %s25, 1
        %s301 = scalar_select %p300, %s25, 1
        %s302 = smul.addr %s299, 2
        %s303 = sadd.s32 %s301, %s302
        %s304 = smul.addr %s303, 4
        %s305 = scalar_lea.vmem %s1, %s304
        %v306 = vld [vmem:[%s2] sm:$0xf]
        %v307 = vld [vmem:[%s2 + $0x4] sm:$0xf]
        %v308 = vld [vmem:[%s2 + $0x8] sm:$0xf]
        %v309 = vld [vmem:[%s2 + $0xc] sm:$0xf]
        %v310 = vld [vmem:[%s2 + $0x10] sm:$0xf]
        %v311 = vld [vmem:[%s2 + $0x14] sm:$0xf]
        %v312 = vld [vmem:[%s2 + $0x18] sm:$0xf]
        %v313 = vld [vmem:[%s2 + $0x1c] sm:$0xf]
        %v314 = vld [vmem:[%s2 + $0x20] sm:$0xf]
        %v315 = vld [vmem:[%s3] sm:$0xf]
        %v316 = vld [vmem:[%s4] sm:$0xff]
        %v317 = vld [vmem:[%s5] sm:$0xff]
        %v318 = vld [vmem:[%s305] sm:$0xf]
        %320 = vrot.lane.b32.xlu0 %v318, 16
        %v321 = vpop.permute.xlu0 %320
        %vm323 = vcmask 130048
        %324 = vrot.lane.b32.xlu0 %v318, 112
        %v325 = vpop.permute.xlu0 %324
        %328 = vset.pattern.permute.xlu0 0
        %329 = vperm.xlu0 %328, %v307
        %v330 = vpop.permute.xlu0 %329
        %v332 = vmul.f32 %v330, %v321
        %334 = vset.pattern.permute.xlu0 0
        %335 = vperm.xlu0 %334, %v310
        %v336 = vpop.permute.xlu0 %335
        %v338 = vmul.f32 %v336, %v318
        %v339 = vadd.f32 %v332, %v338
        %341 = vset.pattern.permute.xlu0 0
        %342 = vperm.xlu0 %341, %v313
        %v343 = vpop.permute.xlu0 %342
        %v345 = vmul.f32 %v343, %v325
        %v346 = vadd.f32 %v339, %v345
        %348 = vset.pattern.permute.xlu0 0
        %349 = vperm.xlu0 %348, %v306
        %v350 = vpop.permute.xlu0 %349
        %v352 = vmul.f32 %v350, %v321
        %354 = vset.pattern.permute.xlu0 0
        %355 = vperm.xlu0 %354, %v309
        %v356 = vpop.permute.xlu0 %355
        %v358 = vmul.f32 %v356, %v318
        %v359 = vadd.f32 %v352, %v358
        %361 = vset.pattern.permute.xlu0 0
        %362 = vperm.xlu0 %361, %v312
        %v363 = vpop.permute.xlu0 %362
        %v365 = vmul.f32 %v363, %v325
        %v366 = vadd.f32 %v359, %v365
        %368 = vset.pattern.permute.xlu0 0
        %369 = vperm.xlu0 %368, %v308
        %v370 = vpop.permute.xlu0 %369
        %v372 = vmul.f32 %v370, %v321
        %374 = vset.pattern.permute.xlu0 0
        %375 = vperm.xlu0 %374, %v311
        %v376 = vpop.permute.xlu0 %375
        %v378 = vmul.f32 %v376, %v318
        %v379 = vadd.f32 %v372, %v378
        %381 = vset.pattern.permute.xlu0 0
        %382 = vperm.xlu0 %381, %v314
        %v383 = vpop.permute.xlu0 %382
        %v385 = vmul.f32 %v383, %v325
        %v386 = vadd.f32 %v379, %v385
        %v387 = vlaneseq
        %v388 = vand.u32 %v387, 127
        %vm389 = vcmp.lt.s32.totalorder %v388, 0
        %v390 = vsub.s32 0, %v388
        %v391 = vsel %vm389, %v390, %v388
        %v392 = vshrl.u32 %v391, 4
        %v393 = vand.u32 %v391, 15
        %v394 = vsub.s32 0, %v393
        %v395 = vsel %vm389, %v394, %v393
        %vm396 = vcmp.ne.s32.totalorder %v395, 0
        %vm397 = vcmp.lt.s32.totalorder %v395, 0
        %vm398 = vmand %vm397, %vm396
        %v399 = vadd.s32 %v395, 16
        %v400 = vsel %vm398, %v399, %v395
        %vm401 = vcmp.ne.s32.totalorder %v400, 0
        %403 = vrot.lane.b32.xlu0 %v366, 1
        %v404 = vpop.permute.xlu0 %403
        %vm406 = vcmask 7168
        %v407 = vsel %vm401, 1, 0
        %vm408 = vcmp.eq.s32.totalorder %v407, 1
        %v409 = vsel %vm408, %v404, 0.0
        %v410 = vadd.f32 %v346, %v409
        %vm411 = vcmp.ne.s32.totalorder %v400, 15
        %413 = vrot.lane.b32.xlu0 %v386, 127
        %v414 = vpop.permute.xlu0 %413
        %v416 = vsel %vm411, 1, 0
        %vm417 = vcmp.eq.s32.totalorder %v416, 1
        %v418 = vsel %vm417, %v414, 0.0
        %v419 = vadd.f32 %v410, %v418
        %421 = vset.pattern.permute.xlu0 0
        %422 = vperm.xlu0 %421, %v315
        %v423 = vpop.permute.xlu0 %422
        %v425 = vadd.f32 %v419, %v423
        %v426 = vmul.f32 %v425, 0.5
        %v427 = vmul.f32 %v425, 0.70710677
        %v428 = verf.f32.pop %v427
        %v429 = vadd.f32 %v428, 1.0
        %v430 = vmul.f32 %v426, %v429
        %432 = vset.pattern.permute.xlu0 0
        %433 = vperm.xlu0 %432, %v316
        %v434 = vpop.permute.xlu0 %433
        %v436 = vlaneseq
        %v437 = vshrl.u32 %v436, 7
        %v438 = vsub.s32 0, %v437
        %v439 = vrot.slane %v430, %v438
        %v440 = vmul.f32 %v434, %v439
        %441 = vset.pattern.permute.xlu0 1
        %442 = vperm.xlu0 %441, %v316
        %v443 = vpop.permute.xlu0 %442
        %v445 = vlaneseq
        %v446 = vshrl.u32 %v445, 7
        %v447 = vsub.s32 1, %v446
        %v448 = vrot.slane %v430, %v447
        %v449 = vmul.f32 %v443, %v448
        %v450 = vadd.f32 %v440, %v449
        %451 = vset.pattern.permute.xlu0 2
        %452 = vperm.xlu0 %451, %v316
        %v453 = vpop.permute.xlu0 %452
        %v455 = vlaneseq
        %v456 = vshrl.u32 %v455, 7
        %v457 = vsub.s32 2, %v456
        %v458 = vrot.slane %v430, %v457
        %v459 = vmul.f32 %v453, %v458
        %v460 = vadd.f32 %v450, %v459
        %461 = vset.pattern.permute.xlu0 3
        %462 = vperm.xlu0 %461, %v316
        %v463 = vpop.permute.xlu0 %462
        %v465 = vlaneseq
        %v466 = vshrl.u32 %v465, 7
        %v467 = vsub.s32 3, %v466
        %v468 = vrot.slane %v430, %v467
        %v469 = vmul.f32 %v463, %v468
        %v470 = vadd.f32 %v460, %v469
        %472 = vset.pattern.permute.xlu0 0
        %473 = vperm.xlu0 %472, %v317
        %v474 = vpop.permute.xlu0 %473
        %v476 = vadd.f32 %v470, %v474
        %v477 = vmul.f32 %v476, 0.5
        %v478 = vmul.f32 %v476, 0.70710677
        %v479 = verf.f32.pop %v478
        %v480 = vadd.f32 %v479, 1.0
        %v481 = vmul.f32 %v477, %v480
        %482 = vst [vmem:[%s289] sm:$0xff] %v481
        %v483 = vld [vmem:[%s297] sm:$0xff]
        %v484 = vld [vmem:[%s305] sm:$0xf]
        %v485 = vmul.f32 %v330, %v483
        %v486 = vmul.f32 %v336, %v484
        %v487 = vadd.f32 %v485, %v486
        %v488 = vmul.f32 %v343, %v484
        %490 = vrot.lane.b32.xlu0 %v488, 112
        %v491 = vpop.permute.xlu0 %490
        %v493 = vadd.f32 %v487, %v491
        %v494 = vmul.f32 %v350, %v483
        %v495 = vmul.f32 %v356, %v484
        %v496 = vadd.f32 %v494, %v495
        %v497 = vmul.f32 %v363, %v484
        %499 = vrot.lane.b32.xlu0 %v497, 112
        %v500 = vpop.permute.xlu0 %499
        %v502 = vadd.f32 %v496, %v500
        %v503 = vmul.f32 %v370, %v483
        %v504 = vmul.f32 %v376, %v484
        %v505 = vadd.f32 %v503, %v504
        %v506 = vmul.f32 %v383, %v484
        %508 = vrot.lane.b32.xlu0 %v506, 112
        %v509 = vpop.permute.xlu0 %508
        %v511 = vadd.f32 %v505, %v509
        %513 = vrot.lane.b32.xlu0 %v502, 1
        %v514 = vpop.permute.xlu0 %513
        %v516 = vsel %vm406, 0.0, %v514
        %v517 = vadd.f32 %v493, %v516
        %519 = vrot.lane.b32.xlu0 %v511, 127
        %v520 = vpop.permute.xlu0 %519
        %vm522 = vcmask 121856
        %v523 = vsel %vm522, %v520, 0.0
        %v524 = vadd.f32 %v517, %v523
        %v525 = vadd.f32 %v524, %v423
        %v526 = vmul.f32 %v525, 0.5
        %v527 = vmul.f32 %v525, 0.70710677
        %v528 = verf.f32.pop %v527
        %v529 = vadd.f32 %v528, 1.0
        %v530 = vmul.f32 %v526, %v529
        %v531 = vlaneseq
        %v532 = vshrl.u32 %v531, 7
        %v533 = vsub.s32 0, %v532
        %v534 = vrot.slane %v530, %v533
        %v535 = vmul.f32 %v434, %v534
        %v536 = vlaneseq
        %v537 = vshrl.u32 %v536, 7
        %v538 = vsub.s32 1, %v537
        %v539 = vrot.slane %v530, %v538
        %v540 = vmul.f32 %v443, %v539
        %v541 = vadd.f32 %v535, %v540
        %v542 = vlaneseq
        %v543 = vshrl.u32 %v542, 7
        %v544 = vsub.s32 2, %v543
        %v545 = vrot.slane %v530, %v544
        %v546 = vmul.f32 %v453, %v545
        %v547 = vadd.f32 %v541, %v546
        %v548 = vlaneseq
        %v549 = vshrl.u32 %v548, 7
        %v550 = vsub.s32 3, %v549
        %v551 = vrot.slane %v530, %v550
        %v552 = vmul.f32 %v463, %v551
        %v553 = vadd.f32 %v547, %v552
        %v554 = vadd.f32 %v553, %v474
        %v555 = vmul.f32 %v554, 0.5
        %v556 = vmul.f32 %v554, 0.70710677
        %v557 = verf.f32.pop %v556
        %v558 = vadd.f32 %v557, 1.0
        %v559 = vmul.f32 %v555, %v558
        %560 = vst.msk [vmem:[%s289] sm:$0xff] %vm323, %v559
        %v561 = vmul.f32 %v330, %v484
        %563 = vrot.lane.b32.xlu0 %v486, 112
        %v564 = vpop.permute.xlu0 %563
        %v566 = vadd.f32 %v561, %v564
        %v568 = vrot.slane %v483, 4
        %v570 = vmul.f32 %v343, %v568
        %572 = vrot.lane.b32.xlu0 %v570, 96
        %v573 = vpop.permute.xlu0 %572
        %v575 = vadd.f32 %v566, %v573
        %v576 = vmul.f32 %v350, %v484
        %578 = vrot.lane.b32.xlu0 %v495, 112
        %v579 = vpop.permute.xlu0 %578
        %v581 = vadd.f32 %v576, %v579
        %v582 = vmul.f32 %v363, %v568
        %584 = vrot.lane.b32.xlu0 %v582, 96
        %v585 = vpop.permute.xlu0 %584
        %v587 = vadd.f32 %v581, %v585
        %v588 = vmul.f32 %v370, %v484
        %590 = vrot.lane.b32.xlu0 %v504, 112
        %v591 = vpop.permute.xlu0 %590
        %v593 = vadd.f32 %v588, %v591
        %v594 = vmul.f32 %v383, %v568
        %596 = vrot.lane.b32.xlu0 %v594, 96
        %v597 = vpop.permute.xlu0 %596
        %v599 = vadd.f32 %v593, %v597
        %601 = vrot.lane.b32.xlu0 %v587, 33
        %v602 = vpop.permute.xlu0 %601
        %v604 = vsel %vm406, 0.0, %v602
        %606 = vrot.lane.b32.xlu0 %v604, 96
        %v607 = vpop.permute.xlu0 %606
        %v609 = vadd.f32 %v575, %v607
        %611 = vrot.lane.b32.xlu0 %v599, 31
        %v612 = vpop.permute.xlu0 %611
        %v614 = vsel %vm522, %v612, 0.0
        %616 = vrot.lane.b32.xlu0 %v614, 96
        %v617 = vpop.permute.xlu0 %616
        %v619 = vadd.f32 %v609, %v617
        %v620 = vadd.f32 %v619, %v423
        %v621 = vmul.f32 %v620, 0.5
        %v622 = vmul.f32 %v620, 0.70710677
        %v623 = verf.f32.pop %v622
        %v624 = vadd.f32 %v623, 1.0
        %v625 = vmul.f32 %v621, %v624
        %v626 = vlaneseq
        %v627 = vshrl.u32 %v626, 7
        %v628 = vsub.s32 0, %v627
        %v629 = vrot.slane %v625, %v628
        %v630 = vmul.f32 %v434, %v629
        %v631 = vlaneseq
        %v632 = vshrl.u32 %v631, 7
        %v633 = vsub.s32 1, %v632
        %v634 = vrot.slane %v625, %v633
        %v635 = vmul.f32 %v443, %v634
        %v636 = vadd.f32 %v630, %v635
        %v637 = vlaneseq
        %v638 = vshrl.u32 %v637, 7
        %v639 = vsub.s32 2, %v638
        %v640 = vrot.slane %v625, %v639
        %v641 = vmul.f32 %v453, %v640
        %v642 = vadd.f32 %v636, %v641
        %v643 = vlaneseq
        %v644 = vshrl.u32 %v643, 7
        %v645 = vsub.s32 3, %v644
        %v646 = vrot.slane %v625, %v645
        %v647 = vmul.f32 %v463, %v646
        %v648 = vadd.f32 %v642, %v647
        %v649 = vadd.f32 %v648, %v474
        %v650 = vmul.f32 %v649, 0.5
        %v651 = vmul.f32 %v649, 0.70710677
        %v652 = verf.f32.pop %v651
        %v653 = vadd.f32 %v652, 1.0
        %v654 = vmul.f32 %v650, %v653
        %656 = vrot.lane.b32.xlu0 %v654, 16
        %v657 = vpop.permute.xlu0 %656
        %vm659 = vcmask 1048448
        %660 = vst.msk [vmem:[%s289] sm:$0xff] %vm659, %v657
        %s661 = sand.u32 %s182, 1
        %s662 = scalar_lea.sflag [#allocation3], %s661
        %s663 = sand.u32 %s182, 1
        %s664 = smul.addr %s663, 8
        %s665 = scalar_lea.vmem [#allocation2], %s664
        // Predicated region
        $region45: #{tpu_custom_call.1} parent=43 // pred_check
          %p666 = pneg %p192
        $region46: #{tpu_custom_call.1} parent=43 // pred_check_branch
          %668 = sbr.rel (%p666) target = $region48
        $region47: #{tpu_custom_call.1} parent=43 // pred_region
          %s670 = ssub.s32 128, 128
          %671 = vsyncadd %s662, %s670
          %s672 = smul.addr %s24, 2
          %s673 = sadd.s32 %s25, %s672
          %s674 = smul.addr %s673, 128
          %s675 = scalar_lea.hbm %s6, %s674
          %s677 = sshll.u32 %s665, 4
          %s678 = int_to_ptr.vmem [resolvable:$true] %s677
          %680 = dma.vmem_to_hbm [thread:$0]  %s678, 128, %s675, %s662
        $region48: #{tpu_custom_call.1} parent=43 // pred_fallthru
          _
      $region44: #{tpu_custom_call.1} parent=5 // pred_fallthru
        _
      %p681 = scmp.le.s32.totalorder 2, %s15
      // Predicated region
      $region49: #{tpu_custom_call.1} parent=5 // pred_check
        %p682 = pneg %p681
      $region50: #{tpu_custom_call.1} parent=5 // pred_check_branch
        %684 = sbr.rel (%p682) target = $region52
      $region51: #{tpu_custom_call.1} parent=5 // pred_region
        %s685 = ssub.s32 %s15, 2
        // Predicated region
        $region53: #{tpu_custom_call.1} parent=51 // pred_check
          %p686 = pneg %p198
        $region54: #{tpu_custom_call.1} parent=51 // pred_check_branch
          %688 = sbr.rel (%p686) target = $region56
        $region55: #{tpu_custom_call.1} parent=51 // pred_region
          %s689 = sand.u32 %s183, 1
          %s690 = scalar_lea.sflag [#allocation3], %s689
          %s691 = sand.u32 %s183, 1
          %s692 = smul.addr %s691, 8
          %s693 = scalar_lea.vmem [#allocation2], %s692
          %694 = dma.done %s690, 128
        $region56: #{tpu_custom_call.1} parent=51 // pred_fallthru
          _
      $region52: #{tpu_custom_call.1} parent=5 // pred_fallthru
        _
    $region6: #{tpu_custom_call.1} parent=1 // loop_footer
      %s19 = sadd.s32 1, %s15
    $region7: #{tpu_custom_call.1} parent=1 // loop_footer_branch
      %14 = sbr.rel target = $region3
    $region8: #{tpu_custom_call.1} parent=1 // loop_exit
      _
    %695 = vsyncpa [#allocation3], 1
    %s696 = scalar_lea.sflag [#allocation3], 1
    %697 = vsyncpa %s696, 1

</llo_original>
